<compile_context>
chip_gen: v6e
topology: v6e:2x2x1
jax: 0.10.0
libtpu: 0.0.40
codegen_flags: <defaults>
</compile_context>

<pallas_src>
import functools

import numpy as np
import jax
import jax.numpy as jnp
from jax.experimental import pallas as pl
from jax.experimental.pallas import tpu as pltpu


def _conv_out_len(L, kernel=4, stride=2, padding=1, dilation=1):
    return (L + 2 * padding - dilation * (kernel - 1) - 1) // stride + 1


# ------------------------------ fused Pallas kernel ------------------------------ #

def _decoder_kernel(z_ref, w1_ref, b1_ref, w2_ref, b2_ref, w3_ref, b3_ref,
                    wc1_ref, bc1_ref, wc2_ref, bc2_ref, wc3_ref, bc3_ref,
                    o_ref, *, B, L3, conv_in):
    f32 = jnp.float32
    bf16 = jnp.bfloat16
    relu = lambda v: jnp.maximum(v, 0.0)
    sigmoid = lambda v: 1.0 / (1.0 + jnp.exp(-v))      # exp hits the EUP slot

    def dot(a, w_ref):
        # bf16 operands on the MXU, f32 accumulation; elementwise stays f32.
        return jnp.dot(a.astype(bf16), w_ref[...], preferred_element_type=f32)

    # ---------------- fused 3-layer MLP ---------------- #
    h = relu(dot(z_ref[...], w1_ref) + b1_ref[...])
    h = relu(dot(h, w2_ref) + b2_ref[...])
    h = relu(dot(h, w3_ref) + b3_ref[...])              # (B, L3*conv_in), col = j*conv_in + c

    # Re-pack into the first conv "phase": rows ordered (j-major, batch-minor) so
    # +/-1 sequence shifts are row-block shifts by B rows (batch is the fast index).
    x0 = jnp.concatenate(
        [h[:, j * conv_in:(j + 1) * conv_in] for j in range(L3)], axis=0)   # (L3*B, conv_in)
    phases = [x0]

    def convt_layer(phases, wc_ref, bc_ref, act):
        # Phase-split ConvTranspose1d(k=4, s=2, p=1).  With P phases, phase p row j
        # holds sequence position t = P*j + p.
        #   out_phase[2p][j]   = X_p[j] @ W1 + prev_p[j] @ W3
        #   out_phase[2p+1][j] = X_p[j] @ W2 + next_p[j] @ W0
        # prev_p = X_{p-1} (p>0) else shift_down(X_{P-1});
        # next_p = X_{p+1} (p<P-1) else shift_up(X_0).
        # All taps & phases collapse into one (P*rows, 3*Cin) @ (3*Cin, 2*Cout) matmul.
        P = len(phases)
        rows, Cin = phases[0].shape
        zblk = jnp.zeros((B, Cin), f32)
        shift_dn_last = jnp.concatenate([zblk, phases[-1][:-B, :]], axis=0)
        shift_up_first = jnp.concatenate([phases[0][B:, :], zblk], axis=0)

        prevs = [phases[p - 1] if p > 0 else shift_dn_last for p in range(P)]
        nexts = [phases[p + 1] if p < P - 1 else shift_up_first for p in range(P)]

        def cat0(blks):
            return blks[0] if len(blks) == 1 else jnp.concatenate(blks, axis=0)

        # Category-first packing: 3 sublane concats + 1 lane concat (cheaper than
        # P lane concats of 3 small pieces each).
        xall = jnp.concatenate([cat0(list(phases)), cat0(prevs), cat0(nexts)],
                               axis=1)                                        # (P*rows, 3*Cin)
        yall = act(dot(xall, wc_ref) + bc_ref[...])                           # (P*rows, 2*Cout)

        cout = wc_ref.shape[1] // 2
        new_phases = []
        for p in range(P):
            blk = yall[p * rows:(p + 1) * rows, :]
            new_phases.append(blk[:, :cout])                                  # output phase 2p
            new_phases.append(blk[:, cout:])                                  # output phase 2p+1
        return new_phases, yall

    phases, _ = convt_layer(phases, wc1_ref, bc1_ref, relu)
    phases, _ = convt_layer(phases, wc2_ref, bc2_ref, relu)
    _, yfinal = convt_layer(phases, wc3_ref, bc3_ref, sigmoid)
    o_ref[...] = yfinal                                                       # (4*L3*B, 2*n_chan)


# -------------------------------- decoder wrapper -------------------------------- #

def decoder_seq_forward(z, kp, img_size):
    L_in, n_chan = img_size[0], img_size[-1]
    B = z.shape[0]
    conv_in = 128 // (2 * 2)
    L3 = _conv_out_len(_conv_out_len(_conv_out_len(L_in)))
    # Model/shape assumption of DecoderSeq: it reconstructs L_in exactly only when
    # the three stride-2 transposed convs invert the length math, i.e. L_in == 8*L3.
    assert L_in == 8 * L3, "DecoderSeq requires L_in == 8 * L_out3"

    kern = functools.partial(_decoder_kernel, B=B, L3=L3, conv_in=conv_in)
    vmem_spec = pl.BlockSpec(memory_space=pltpu.MemorySpace.VMEM)
    yflat = pl.pallas_call(
        kern,
        out_shape=jax.ShapeDtypeStruct((4 * L3 * B, 2 * n_chan), jnp.float32),
        in_specs=[vmem_spec] * 13,
        out_specs=vmem_spec,
    )(z, kp['w1'], kp['b1'], kp['w2'], kp['b2'], kp['w3'], kp['b3'],
      kp['wc1'], kp['bc1'], kp['wc2'], kp['bc2'], kp['wc3'], kp['bc3'])

    # Pure layout glue: yflat[row = p*(L3*B) + j*B + b, lane = parity*n_chan + c]
    # is output position t = 8*j + 2*p + parity.
    y = yflat.reshape(4, L3, B, 2, n_chan)
    y = y.transpose(2, 1, 0, 3, 4)                 # (B, L3, 4, 2, n_chan)
    return y.reshape(B, L_in, n_chan)              # channel-last, == torch permute(0,2,1)


# --------------------------- params (torch layout + prep) --------------------------- #

def init_torch_params(key, latent_dim, hidden_dim, conv_in, L3, hid_channels, n_chan):
    keys = jax.random.split(key, 12)

    def u(k, shape, fan_in):
        bound = 1.0 / np.sqrt(fan_in)
        return jax.random.uniform(k, shape, jnp.float32, -bound, bound)

    return {
        # nn.Linear weights, torch layout (out, in)
        'lin1_w': u(keys[0], (hidden_dim, latent_dim), latent_dim),
        'lin1_b': u(keys[1], (hidden_dim,), latent_dim),
        'lin2_w': u(keys[2], (hidden_dim, hidden_dim), hidden_dim),
        'lin2_b': u(keys[3], (hidden_dim,), hidden_dim),
        'lin3_w': u(keys[4], (conv_in * L3, hidden_dim), hidden_dim),
        'lin3_b': u(keys[5], (conv_in * L3,), hidden_dim),
        # nn.ConvTranspose1d weights, torch layout (Cin, Cout, K)
        'ct1_w': u(keys[6], (conv_in, hid_channels // 2, 4), conv_in * 4),
        'ct1_b': u(keys[7], (hid_channels // 2,), conv_in * 4),
        'ct2_w': u(keys[8], (hid_channels // 2, hid_channels, 4), (hid_channels // 2) * 4),
        'ct2_b': u(keys[9], (hid_channels,), (hid_channels // 2) * 4),
        'ct3_w': u(keys[10], (hid_channels, n_chan, 4), hid_channels * 4),
        'ct3_b': u(keys[11], (n_chan,), hid_channels * 4),
    }


def prepare_kernel_params(tp, conv_in, L3, mxu_dtype=jnp.bfloat16):
    """Repack torch-layout params into the fused kernel's layout.

    Linear weights -> (in, out); lin3 columns permuted to (j, c) order so the MLP
    emits channel-last directly.  Each ConvTranspose1d is prepacked into
    Wcat = [[W1, W2], [W3, 0], [0, W0]] and bcat = [b | b] so the 4 taps collapse
    into one MXU matmul per layer.  Matmul weights stored bf16, biases f32.
    """
    f32 = jnp.float32

    def lin(wname, bname):
        return (jnp.asarray(tp[wname]).T.astype(mxu_dtype),
                jnp.asarray(tp[bname])[None, :].astype(f32))

    w1, b1 = lin('lin1_w', 'lin1_b')
    w2, b2 = lin('lin2_w', 'lin2_b')

    hidden = tp['lin2_w'].shape[0]
    w3 = jnp.asarray(tp['lin3_w']).T                       # (hidden, conv_in*L3), col = c*L3 + j
    w3 = w3.reshape(hidden, conv_in, L3).transpose(0, 2, 1).reshape(hidden, L3 * conv_in)
    b3 = jnp.asarray(tp['lin3_b']).reshape(conv_in, L3).T.reshape(1, L3 * conv_in)
    w3, b3 = w3.astype(mxu_dtype), b3.astype(f32)

    def conv(wname, bname):
        W = jnp.asarray(tp[wname])                          # (Cin, Cout, K=4)
        b = jnp.asarray(tp[bname])
        A, Bw, C, D = W[:, :, 1], W[:, :, 3], W[:, :, 2], W[:, :, 0]
        Z = jnp.zeros_like(A)
        wcat = jnp.concatenate([jnp.concatenate([A, C], axis=1),
                                jnp.concatenate([Bw, Z], axis=1),
                                jnp.concatenate([Z, D], axis=1)], axis=0)   # (3Cin, 2Cout)
        bcat = jnp.concatenate([b, b])[None, :]                              # (1, 2Cout)
        return wcat.astype(mxu_dtype), bcat.astype(f32)

    wc1, bc1 = conv('ct1_w', 'ct1_b')
    wc2, bc2 = conv('ct2_w', 'ct2_b')
    wc3, bc3 = conv('ct3_w', 'ct3_b')
    return dict(w1=w1, b1=b1, w2=w2, b2=b2, w3=w3, b3=b3,
                wc1=wc1, bc1=bc1, wc2=wc2, bc2=bc2, wc3=wc3, bc3=bc3)


# --------------------------------- numpy reference --------------------------------- #

def _ref_forward(z, tp, img_size):
    z = np.asarray(z, np.float32)
    p = {k: np.asarray(v, np.float32) for k, v in tp.items()}
    relu = lambda a: np.maximum(a, 0.0)
    sigmoid = lambda a: 1.0 / (1.0 + np.exp(-a))

    L_in, n_chan = img_size[0], img_size[-1]
    B = z.shape[0]
    conv_in = 128 // 4
    L3 = _conv_out_len(_conv_out_len(_conv_out_len(L_in)))

    x = relu(z @ p['lin1_w'].T + p['lin1_b'])
    x = relu(x @ p['lin2_w'].T + p['lin2_b'])
    x = relu(x @ p['lin3_w'].T + p['lin3_b'])
    x = x.reshape(B, conv_in, L3)                   # NCL, matches torch .view

    def convt(x_ncl, W, bias):                      # exact ConvTranspose1d(4, s=2, p=1)
        Bb, Cin, Lin = x_ncl.shape
        _, Cout, K = W.shape
        Lout = 2 * Lin
        out = np.zeros((Bb, Cout, Lout), np.float32)
        for t in range(Lout):
            for i in range(Lin):
                k = t + 1 - 2 * i
                if 0 <= k < K:
                    out[:, :, t] += x_ncl[:, :, i] @ W[:, :, k]
        out += bias.reshape(1, Cout, 1)
        return out

    x = relu(convt(x, p['ct1_w'], p['ct1_b']))
    x = relu(convt(x, p['ct2_w'], p['ct2_b']))
    x = sigmoid(convt(x, p['ct3_w'], p['ct3_b']))
    return x.transpose(0, 2, 1)                     # (B, L_in, n_chan)


# -------------------------------------- main -------------------------------------- #

if __name__ == "__main__":
    img_size = (32, 4)          # (L_in, n_chan): small analogue of e.g. (1028, 1)
    latent_dim = 10
    batch = 2
    hidden_dim = 256
    hid_channels = 128
    conv_in = hid_channels // (2 * 2)
    L_in, n_chan = img_size
    L3 = _conv_out_len(_conv_out_len(_conv_out_len(L_in)))

    key = jax.random.PRNGKey(0)
    kz, kp = jax.random.split(key)
    z = jax.random.normal(kz, (batch, latent_dim), jnp.float32)

    torch_params = init_torch_params(kp, latent_dim, hidden_dim, conv_in, L3,
                                     hid_channels, n_chan)
    kparams = prepare_kernel_params(torch_params, conv_in, L3)

    fwd = jax.jit(decoder_seq_forward, static_argnums=2)
    out = jax.block_until_ready(fwd(z, kparams, img_size))

    assert out.shape == (batch, L_in, n_chan), out.shape
    ref = _ref_forward(z, torch_params, img_size)
    np.testing.assert_allclose(np.asarray(out), ref, rtol=2e-2, atol=2e-2)

    print("KERNEL_OK")
</pallas_src>

<mosaic_0001>
module attributes {stable_mosaic.version = 11 : i64} {
  func.func @_decoder_kernel(%arg0: memref<2x10xf32, #tpu.memory_space<vmem>>, %arg1: memref<10x256xbf16, #tpu.memory_space<vmem>>, %arg2: memref<1x256xf32, #tpu.memory_space<vmem>>, %arg3: memref<256x256xbf16, #tpu.memory_space<vmem>>, %arg4: memref<1x256xf32, #tpu.memory_space<vmem>>, %arg5: memref<256x128xbf16, #tpu.memory_space<vmem>>, %arg6: memref<1x128xf32, #tpu.memory_space<vmem>>, %arg7: memref<96x128xbf16, #tpu.memory_space<vmem>>, %arg8: memref<1x128xf32, #tpu.memory_space<vmem>>, %arg9: memref<192x256xbf16, #tpu.memory_space<vmem>>, %arg10: memref<1x256xf32, #tpu.memory_space<vmem>>, %arg11: memref<384x8xbf16, #tpu.memory_space<vmem>>, %arg12: memref<1x8xf32, #tpu.memory_space<vmem>>, %arg13: memref<32x8xf32, #tpu.memory_space<vmem>>) attributes {dimension_semantics = [], scalar_prefetch = 0 : i64, scratch_operands = 0 : i64, tpu.core_type = #tpu.core_type<tc>} {
    %c0 = arith.constant 0 : index
    %c0_0 = arith.constant 0 : index
    %0 = vector.load %arg0[%c0, %c0_0] : memref<2x10xf32, #tpu.memory_space<vmem>>, vector<2x10xf32>
    %1 = arith.truncf %0 : vector<2x10xf32> to vector<2x10xbf16>
    %c0_1 = arith.constant 0 : index
    %c0_2 = arith.constant 0 : index
    %2 = vector.load %arg1[%c0_1, %c0_2] : memref<10x256xbf16, #tpu.memory_space<vmem>>, vector<10x256xbf16>
    %cst = arith.constant dense<0.000000e+00> : vector<2x256xf32>
    %3 = tpu.matmul %1, %2, %cst {dimension_numbers = #tpu.dot_dimension_numbers<[1], [0], [0], [1], [0, 0, 1, 1], [], []>} : vector<2x10xbf16>, vector<10x256xbf16>, vector<2x256xf32> -> vector<2x256xf32>
    %c0_3 = arith.constant 0 : index
    %c0_4 = arith.constant 0 : index
    %4 = vector.load %arg2[%c0_3, %c0_4] : memref<1x256xf32, #tpu.memory_space<vmem>>, vector<1x256xf32>
    %5 = vector.broadcast %4 : vector<1x256xf32> to vector<2x256xf32>
    %6 = arith.addf %3, %5 : vector<2x256xf32>
    %cst_5 = arith.constant 0.000000e+00 : f32
    %7 = vector.broadcast %cst_5 : f32 to vector<2x256xf32>
    %8 = arith.maximumf %6, %7 : vector<2x256xf32>
    %9 = arith.truncf %8 : vector<2x256xf32> to vector<2x256xbf16>
    %c0_6 = arith.constant 0 : index
    %c0_7 = arith.constant 0 : index
    %10 = vector.load %arg3[%c0_6, %c0_7] : memref<256x256xbf16, #tpu.memory_space<vmem>>, vector<256x256xbf16>
    %cst_8 = arith.constant dense<0.000000e+00> : vector<2x256xf32>
    %11 = tpu.matmul %9, %10, %cst_8 {dimension_numbers = #tpu.dot_dimension_numbers<[1], [0], [0], [1], [0, 0, 1, 1], [], []>} : vector<2x256xbf16>, vector<256x256xbf16>, vector<2x256xf32> -> vector<2x256xf32>
    %c0_9 = arith.constant 0 : index
    %c0_10 = arith.constant 0 : index
    %12 = vector.load %arg4[%c0_9, %c0_10] : memref<1x256xf32, #tpu.memory_space<vmem>>, vector<1x256xf32>
    %13 = vector.broadcast %12 : vector<1x256xf32> to vector<2x256xf32>
    %14 = arith.addf %11, %13 : vector<2x256xf32>
    %cst_11 = arith.constant 0.000000e+00 : f32
    %15 = vector.broadcast %cst_11 : f32 to vector<2x256xf32>
    %16 = arith.maximumf %14, %15 : vector<2x256xf32>
    %17 = arith.truncf %16 : vector<2x256xf32> to vector<2x256xbf16>
    %c0_12 = arith.constant 0 : index
    %c0_13 = arith.constant 0 : index
    %18 = vector.load %arg5[%c0_12, %c0_13] : memref<256x128xbf16, #tpu.memory_space<vmem>>, vector<256x128xbf16>
    %cst_14 = arith.constant dense<0.000000e+00> : vector<2x128xf32>
    %19 = tpu.matmul %17, %18, %cst_14 {dimension_numbers = #tpu.dot_dimension_numbers<[1], [0], [0], [1], [0, 0, 1, 1], [], []>} : vector<2x256xbf16>, vector<256x128xbf16>, vector<2x128xf32> -> vector<2x128xf32>
    %c0_15 = arith.constant 0 : index
    %c0_16 = arith.constant 0 : index
    %20 = vector.load %arg6[%c0_15, %c0_16] : memref<1x128xf32, #tpu.memory_space<vmem>>, vector<1x128xf32>
    %21 = vector.broadcast %20 : vector<1x128xf32> to vector<2x128xf32>
    %22 = arith.addf %19, %21 : vector<2x128xf32>
    %cst_17 = arith.constant 0.000000e+00 : f32
    %23 = vector.broadcast %cst_17 : f32 to vector<2x128xf32>
    %24 = arith.maximumf %22, %23 : vector<2x128xf32>
    %25 = vector.extract_strided_slice %24 {offsets = [0, 0], sizes = [2, 32], strides = [1, 1]} : vector<2x128xf32> to vector<2x32xf32>
    %26 = vector.extract_strided_slice %24 {offsets = [0, 32], sizes = [2, 32], strides = [1, 1]} : vector<2x128xf32> to vector<2x32xf32>
    %27 = vector.extract_strided_slice %24 {offsets = [0, 64], sizes = [2, 32], strides = [1, 1]} : vector<2x128xf32> to vector<2x32xf32>
    %28 = vector.extract_strided_slice %24 {offsets = [0, 96], sizes = [2, 32], strides = [1, 1]} : vector<2x128xf32> to vector<2x32xf32>
    %29 = tpu.concatenate %25, %26, %27, %28 in 0 : vector<2x32xf32>, vector<2x32xf32>, vector<2x32xf32>, vector<2x32xf32> -> vector<8x32xf32>
    %cst_18 = arith.constant 0.000000e+00 : f32
    %30 = vector.broadcast %cst_18 : f32 to vector<2x32xf32>
    %31 = vector.extract_strided_slice %29 {offsets = [0, 0], sizes = [6, 32], strides = [1, 1]} : vector<8x32xf32> to vector<6x32xf32>
    %32 = tpu.concatenate %30, %31 in 0 : vector<2x32xf32>, vector<6x32xf32> -> vector<8x32xf32>
    %33 = vector.extract_strided_slice %29 {offsets = [2, 0], sizes = [6, 32], strides = [1, 1]} : vector<8x32xf32> to vector<6x32xf32>
    %34 = tpu.concatenate %33, %30 in 0 : vector<6x32xf32>, vector<2x32xf32> -> vector<8x32xf32>
    %35 = tpu.concatenate %29, %32, %34 in 1 : vector<8x32xf32>, vector<8x32xf32>, vector<8x32xf32> -> vector<8x96xf32>
    %36 = arith.truncf %35 : vector<8x96xf32> to vector<8x96xbf16>
    %c0_19 = arith.constant 0 : index
    %c0_20 = arith.constant 0 : index
    %37 = vector.load %arg7[%c0_19, %c0_20] : memref<96x128xbf16, #tpu.memory_space<vmem>>, vector<96x128xbf16>
    %cst_21 = arith.constant dense<0.000000e+00> : vector<8x128xf32>
    %38 = tpu.matmul %36, %37, %cst_21 {dimension_numbers = #tpu.dot_dimension_numbers<[1], [0], [0], [1], [0, 0, 1, 1], [], []>} : vector<8x96xbf16>, vector<96x128xbf16>, vector<8x128xf32> -> vector<8x128xf32>
    %c0_22 = arith.constant 0 : index
    %c0_23 = arith.constant 0 : index
    %39 = vector.load %arg8[%c0_22, %c0_23] : memref<1x128xf32, #tpu.memory_space<vmem>>, vector<1x128xf32>
    %40 = vector.broadcast %39 : vector<1x128xf32> to vector<8x128xf32>
    %41 = arith.addf %38, %40 : vector<8x128xf32>
    %cst_24 = arith.constant 0.000000e+00 : f32
    %42 = vector.broadcast %cst_24 : f32 to vector<8x128xf32>
    %43 = arith.maximumf %41, %42 : vector<8x128xf32>
    %44 = vector.extract_strided_slice %43 {offsets = [0, 0], sizes = [8, 64], strides = [1, 1]} : vector<8x128xf32> to vector<8x64xf32>
    %45 = vector.extract_strided_slice %43 {offsets = [0, 64], sizes = [8, 64], strides = [1, 1]} : vector<8x128xf32> to vector<8x64xf32>
    %cst_25 = arith.constant 0.000000e+00 : f32
    %46 = vector.broadcast %cst_25 : f32 to vector<2x64xf32>
    %47 = vector.extract_strided_slice %45 {offsets = [0, 0], sizes = [6, 64], strides = [1, 1]} : vector<8x64xf32> to vector<6x64xf32>
    %48 = tpu.concatenate %46, %47 in 0 : vector<2x64xf32>, vector<6x64xf32> -> vector<8x64xf32>
    %49 = vector.extract_strided_slice %44 {offsets = [2, 0], sizes = [6, 64], strides = [1, 1]} : vector<8x64xf32> to vector<6x64xf32>
    %50 = tpu.concatenate %49, %46 in 0 : vector<6x64xf32>, vector<2x64xf32> -> vector<8x64xf32>
    %51 = tpu.concatenate %44, %45 in 0 : vector<8x64xf32>, vector<8x64xf32> -> vector<16x64xf32>
    %52 = tpu.concatenate %48, %44 in 0 : vector<8x64xf32>, vector<8x64xf32> -> vector<16x64xf32>
    %53 = tpu.concatenate %45, %50 in 0 : vector<8x64xf32>, vector<8x64xf32> -> vector<16x64xf32>
    %54 = tpu.concatenate %51, %52, %53 in 1 : vector<16x64xf32>, vector<16x64xf32>, vector<16x64xf32> -> vector<16x192xf32>
    %55 = arith.truncf %54 : vector<16x192xf32> to vector<16x192xbf16>
    %c0_26 = arith.constant 0 : index
    %c0_27 = arith.constant 0 : index
    %56 = vector.load %arg9[%c0_26, %c0_27] : memref<192x256xbf16, #tpu.memory_space<vmem>>, vector<192x256xbf16>
    %cst_28 = arith.constant dense<0.000000e+00> : vector<16x256xf32>
    %57 = tpu.matmul %55, %56, %cst_28 {dimension_numbers = #tpu.dot_dimension_numbers<[1], [0], [0], [1], [0, 0, 1, 1], [], []>} : vector<16x192xbf16>, vector<192x256xbf16>, vector<16x256xf32> -> vector<16x256xf32>
    %c0_29 = arith.constant 0 : index
    %c0_30 = arith.constant 0 : index
    %58 = vector.load %arg10[%c0_29, %c0_30] : memref<1x256xf32, #tpu.memory_space<vmem>>, vector<1x256xf32>
    %59 = vector.broadcast %58 : vector<1x256xf32> to vector<16x256xf32>
    %60 = arith.addf %57, %59 : vector<16x256xf32>
    %cst_31 = arith.constant 0.000000e+00 : f32
    %61 = vector.broadcast %cst_31 : f32 to vector<16x256xf32>
    %62 = arith.maximumf %60, %61 : vector<16x256xf32>
    %63 = vector.extract_strided_slice %62 {offsets = [0, 0], sizes = [8, 256], strides = [1, 1]} : vector<16x256xf32> to vector<8x256xf32>
    %64 = vector.extract_strided_slice %63 {offsets = [0, 0], sizes = [8, 128], strides = [1, 1]} : vector<8x256xf32> to vector<8x128xf32>
    %65 = vector.extract_strided_slice %63 {offsets = [0, 128], sizes = [8, 128], strides = [1, 1]} : vector<8x256xf32> to vector<8x128xf32>
    %66 = vector.extract_strided_slice %62 {offsets = [8, 0], sizes = [8, 256], strides = [1, 1]} : vector<16x256xf32> to vector<8x256xf32>
    %67 = vector.extract_strided_slice %66 {offsets = [0, 0], sizes = [8, 128], strides = [1, 1]} : vector<8x256xf32> to vector<8x128xf32>
    %68 = vector.extract_strided_slice %66 {offsets = [0, 128], sizes = [8, 128], strides = [1, 1]} : vector<8x256xf32> to vector<8x128xf32>
    %cst_32 = arith.constant 0.000000e+00 : f32
    %69 = vector.broadcast %cst_32 : f32 to vector<2x128xf32>
    %70 = vector.extract_strided_slice %68 {offsets = [0, 0], sizes = [6, 128], strides = [1, 1]} : vector<8x128xf32> to vector<6x128xf32>
    %71 = tpu.concatenate %69, %70 in 0 : vector<2x128xf32>, vector<6x128xf32> -> vector<8x128xf32>
    %72 = vector.extract_strided_slice %64 {offsets = [2, 0], sizes = [6, 128], strides = [1, 1]} : vector<8x128xf32> to vector<6x128xf32>
    %73 = tpu.concatenate %72, %69 in 0 : vector<6x128xf32>, vector<2x128xf32> -> vector<8x128xf32>
    %74 = tpu.concatenate %64, %65, %67, %68 in 0 : vector<8x128xf32>, vector<8x128xf32>, vector<8x128xf32>, vector<8x128xf32> -> vector<32x128xf32>
    %75 = tpu.concatenate %71, %64, %65, %67 in 0 : vector<8x128xf32>, vector<8x128xf32>, vector<8x128xf32>, vector<8x128xf32> -> vector<32x128xf32>
    %76 = tpu.concatenate %65, %67, %68, %73 in 0 : vector<8x128xf32>, vector<8x128xf32>, vector<8x128xf32>, vector<8x128xf32> -> vector<32x128xf32>
    %77 = tpu.concatenate %74, %75, %76 in 1 : vector<32x128xf32>, vector<32x128xf32>, vector<32x128xf32> -> vector<32x384xf32>
    %78 = arith.truncf %77 : vector<32x384xf32> to vector<32x384xbf16>
    %c0_33 = arith.constant 0 : index
    %c0_34 = arith.constant 0 : index
    %79 = vector.load %arg11[%c0_33, %c0_34] : memref<384x8xbf16, #tpu.memory_space<vmem>>, vector<384x8xbf16>
    %cst_35 = arith.constant dense<0.000000e+00> : vector<32x8xf32>
    %80 = tpu.matmul %78, %79, %cst_35 {dimension_numbers = #tpu.dot_dimension_numbers<[1], [0], [0], [1], [0, 0, 1, 1], [], []>} : vector<32x384xbf16>, vector<384x8xbf16>, vector<32x8xf32> -> vector<32x8xf32>
    %c0_36 = arith.constant 0 : index
    %c0_37 = arith.constant 0 : index
    %81 = vector.load %arg12[%c0_36, %c0_37] : memref<1x8xf32, #tpu.memory_space<vmem>>, vector<1x8xf32>
    %82 = vector.broadcast %81 : vector<1x8xf32> to vector<32x8xf32>
    %83 = arith.addf %80, %82 : vector<32x8xf32>
    %cst_38 = arith.constant 0.000000e+00 : f32
    %84 = vector.broadcast %cst_38 : f32 to vector<32x8xf32>
    %85 = arith.subf %84, %83 : vector<32x8xf32>
    %86 = math.exp %85 : vector<32x8xf32>
    %cst_39 = arith.constant 1.000000e+00 : f32
    %87 = vector.broadcast %cst_39 : f32 to vector<32x8xf32>
    %88 = arith.addf %87, %86 : vector<32x8xf32>
    %cst_40 = arith.constant 1.000000e+00 : f32
    %89 = vector.broadcast %cst_40 : f32 to vector<32x8xf32>
    %90 = arith.divf %89, %88 : vector<32x8xf32>
    %c0_41 = arith.constant 0 : index
    %c0_42 = arith.constant 0 : index
    %91 = vector.load %arg13[%c0_41, %c0_42] : memref<32x8xf32, #tpu.memory_space<vmem>>, vector<32x8xf32>
    tpu.vector_store %arg13[%c0_41, %c0_42], %90 {strides = array<i32>} : memref<32x8xf32, #tpu.memory_space<vmem>>, vector<32x8xf32>,
    return
  }
}

</mosaic_0001>

<llo_original>
// kernel: decoder_seq_forward.1
$region0: #{decoder_seq_forward.1}
  #allocation0 [shape = 'u32[]', space=smem, size = 0x4, offset = 0x4, fixed_abs, tag = 'smem constant byte address 0x4 - core index']
  #allocation1 [shape = 'u32[144,128]{1,0:T(1,128)}', space=vmem, size = 0x12000, scoped, tag = 'internal scratch']
  %s0 = inlined_call_operand.vmem [shape: f32[2,10], index: 0, kind: input, shape index: {}]
  %s1 = inlined_call_operand.vmem [shape: bf16[10,256], index: 1, kind: input, shape index: {}]
  %s2 = inlined_call_operand.vmem [shape: f32[1,256], index: 2, kind: input, shape index: {}]
  %s3 = inlined_call_operand.hbm [shape: bf16[256,256], index: 3, kind: input, shape index: {}]
  %s4 = inlined_call_operand.hbm [shape: f32[1,256], index: 4, kind: input, shape index: {}]
  %s5 = inlined_call_operand.hbm [shape: bf16[256,128], index: 5, kind: input, shape index: {}]
  %s6 = inlined_call_operand.vmem [shape: f32[1,128], index: 6, kind: input, shape index: {}]
  %s7 = inlined_call_operand.hbm [shape: bf16[96,128], index: 7, kind: input, shape index: {}]
  %s8 = inlined_call_operand.hbm [shape: f32[1,128], index: 8, kind: input, shape index: {}]
  %s9 = inlined_call_operand.vmem [shape: bf16[192,256], index: 9, kind: input, shape index: {}]
  %s10 = inlined_call_operand.hbm [shape: f32[1,256], index: 10, kind: input, shape index: {}]
  %s11 = inlined_call_operand.vmem [shape: bf16[384,8], index: 11, kind: input, shape index: {}]
  %s12 = inlined_call_operand.hbm [shape: f32[1,8], index: 12, kind: input, shape index: {}]
  %s13 = inlined_call_operand.vmem [shape: f32[32,8], index: 13, kind: output, shape index: {}]
  %s14 = sld [smem:[#allocation0]]
  $region90: #{decoder_seq_forward.1} parent=0
    _
  %s16 = ssub.s32 1, %s14
  %s17 = scalar_select 0, %s16, %s14
  $region1: #{decoder_seq_forward.1} parent=0
    #allocation2 [shape = 'u8[131072]{0}', space=vmem, size = 0x20000, scoped, tag = 'input window, operand 3, single buffered']
    #allocation3 [shape = 's32[1]{0}', space=sflag, size = 0x4, scoped, tag = 'scoped memory for decoder_seq_forward.1']
    #allocation4 [shape = 'u8[1024]{0}', space=vmem, size = 0x400, scoped, tag = 'input window, operand 4, single buffered']
    #allocation5 [shape = 's32[1]{0}', space=sflag, size = 0x4, scoped, tag = 'scoped memory for decoder_seq_forward.1']
    #allocation6 [shape = 'u8[65536]{0}', space=vmem, size = 0x10000, scoped, tag = 'input window, operand 5, single buffered']
    #allocation7 [shape = 'u8[24576]{0}', space=vmem, size = 0x6000, scoped, tag = 'input window, operand 7, single buffered']
    #allocation8 [shape = 's32[1]{0}', space=sflag, size = 0x4, scoped, tag = 'scoped memory for decoder_seq_forward.1']
    #allocation9 [shape = 'u8[512]{0}', space=vmem, size = 0x400, scoped, tag = 'input window, operand 8, single buffered']
    #allocation10 [shape = 'u8[1024]{0}', space=vmem, size = 0x400, scoped, tag = 'input window, operand 10, single buffered']
    #allocation11 [shape = 's32[1]{0}', space=sflag, size = 0x4, scoped, tag = 'scoped memory for decoder_seq_forward.1']
    #allocation12 [shape = 'u8[512]{0}', space=vmem, size = 0x400, scoped, tag = 'input window, operand 12, single buffered']
    %18 = vsyncpa [#allocation3], 0
    %19 = vsyncpa [#allocation5], 0
    %20 = vsyncpa [#allocation8], 0
    %21 = vsyncpa [#allocation11], 0
    // Predicated region
    $region2: #{decoder_seq_forward.1} parent=1 // pred_check
      _
    $region3: #{decoder_seq_forward.1} parent=1 // pred_check_branch
      %23 = sbr.rel (0) target = $region5
    $region4: #{decoder_seq_forward.1} parent=1 // pred_region
      _
    $region5: #{decoder_seq_forward.1} parent=1 // pred_fallthru
      _
    // Predicated region
    $region6: #{decoder_seq_forward.1} parent=1 // pred_check
      _
    $region7: #{decoder_seq_forward.1} parent=1 // pred_check_branch
      %25 = sbr.rel (0) target = $region9
    $region8: #{decoder_seq_forward.1} parent=1 // pred_region
      _
    $region9: #{decoder_seq_forward.1} parent=1 // pred_fallthru
      _
    // Predicated region
    $region10: #{decoder_seq_forward.1} parent=1 // pred_check
      _
    $region11: #{decoder_seq_forward.1} parent=1 // pred_check_branch
      %27 = sbr.rel (0) target = $region13
    $region12: #{decoder_seq_forward.1} parent=1 // pred_region
      _
    $region13: #{decoder_seq_forward.1} parent=1 // pred_fallthru
      _
    // Predicated region
    $region14: #{decoder_seq_forward.1} parent=1 // pred_check
      _
    $region15: #{decoder_seq_forward.1} parent=1 // pred_check_branch
      %29 = sbr.rel (0) target = $region17
    $region16: #{decoder_seq_forward.1} parent=1 // pred_region
      %s31 = ssub.s32 4096, 4096
      %32 = vsyncadd [#allocation3], %s31
      %s33 = sshll.u32 [#allocation2], 4
      %s34 = int_to_ptr.vmem [resolvable:$true] %s33
      %39 = dma.hbm_to_vmem [thread:$0]  %s3, 4096, %s34, [#allocation3], 128, 128, 8
    $region17: #{decoder_seq_forward.1} parent=1 // pred_fallthru
      _
    // Predicated region
    $region18: #{decoder_seq_forward.1} parent=1 // pred_check
      _
    $region19: #{decoder_seq_forward.1} parent=1 // pred_check_branch
      %41 = sbr.rel (0) target = $region21
    $region20: #{decoder_seq_forward.1} parent=1 // pred_region
      %s43 = ssub.s32 32, 32
      %44 = vsyncadd [#allocation5], %s43
      %s46 = sshll.u32 [#allocation4], 4
      %s47 = int_to_ptr.vmem [resolvable:$true] %s46
      %49 = dma.hbm_to_vmem [thread:$0]  %s4, 32, %s47, [#allocation5]
    $region21: #{decoder_seq_forward.1} parent=1 // pred_fallthru
      _
    // Predicated region
    $region22: #{decoder_seq_forward.1} parent=1 // pred_check
      _
    $region23: #{decoder_seq_forward.1} parent=1 // pred_check_branch
      %51 = sbr.rel (0) target = $region25
    $region24: #{decoder_seq_forward.1} parent=1 // pred_region
      %s53 = ssub.s32 2048, 2048
      %54 = vsyncadd [#allocation5], %s53
      %s55 = sshll.u32 [#allocation6], 4
      %s56 = int_to_ptr.vmem [resolvable:$true] %s55
      %61 = dma.hbm_to_vmem [thread:$0]  %s5, 2048, %s56, [#allocation5], 64, 64, 4
    $region25: #{decoder_seq_forward.1} parent=1 // pred_fallthru
      _
    // Predicated region
    $region26: #{decoder_seq_forward.1} parent=1 // pred_check
      _
    $region27: #{decoder_seq_forward.1} parent=1 // pred_check_branch
      %63 = sbr.rel (0) target = $region29
    $region28: #{decoder_seq_forward.1} parent=1 // pred_region
      _
    $region29: #{decoder_seq_forward.1} parent=1 // pred_fallthru
      _
    // Predicated region
    $region30: #{decoder_seq_forward.1} parent=1 // pred_check
      _
    $region31: #{decoder_seq_forward.1} parent=1 // pred_check_branch
      %65 = sbr.rel (0) target = $region33
    $region32: #{decoder_seq_forward.1} parent=1 // pred_region
      %s67 = ssub.s32 768, 768
      %68 = vsyncadd [#allocation8], %s67
      %s69 = sshll.u32 [#allocation7], 4
      %s70 = int_to_ptr.vmem [resolvable:$true] %s69
      %75 = dma.hbm_to_vmem [thread:$0]  %s7, 768, %s70, [#allocation8], 64, 64, 4
    $region33: #{decoder_seq_forward.1} parent=1 // pred_fallthru
      _
    // Predicated region
    $region34: #{decoder_seq_forward.1} parent=1 // pred_check
      _
    $region35: #{decoder_seq_forward.1} parent=1 // pred_check_branch
      %77 = sbr.rel (0) target = $region37
    $region36: #{decoder_seq_forward.1} parent=1 // pred_region
      %s79 = ssub.s32 16, 16
      %80 = vsyncadd [#allocation8], %s79
      %s82 = sshll.u32 [#allocation9], 4
      %s83 = int_to_ptr.vmem [resolvable:$true] %s82
      %85 = dma.hbm_to_vmem [thread:$0]  %s8, 16, %s83, [#allocation8]
    $region37: #{decoder_seq_forward.1} parent=1 // pred_fallthru
      _
    // Predicated region
    $region38: #{decoder_seq_forward.1} parent=1 // pred_check
      _
    $region39: #{decoder_seq_forward.1} parent=1 // pred_check_branch
      %87 = sbr.rel (0) target = $region41
    $region40: #{decoder_seq_forward.1} parent=1 // pred_region
      _
    $region41: #{decoder_seq_forward.1} parent=1 // pred_fallthru
      _
    // Predicated region
    $region42: #{decoder_seq_forward.1} parent=1 // pred_check
      _
    $region43: #{decoder_seq_forward.1} parent=1 // pred_check_branch
      %89 = sbr.rel (0) target = $region45
    $region44: #{decoder_seq_forward.1} parent=1 // pred_region
      %s91 = ssub.s32 32, 32
      %92 = vsyncadd [#allocation11], %s91
      %s94 = sshll.u32 [#allocation10], 4
      %s95 = int_to_ptr.vmem [resolvable:$true] %s94
      %97 = dma.hbm_to_vmem [thread:$0]  %s10, 32, %s95, [#allocation11]
    $region45: #{decoder_seq_forward.1} parent=1 // pred_fallthru
      _
    // Predicated region
    $region46: #{decoder_seq_forward.1} parent=1 // pred_check
      _
    $region47: #{decoder_seq_forward.1} parent=1 // pred_check_branch
      %99 = sbr.rel (0) target = $region49
    $region48: #{decoder_seq_forward.1} parent=1 // pred_region
      _
    $region49: #{decoder_seq_forward.1} parent=1 // pred_fallthru
      _
    // Predicated region
    $region50: #{decoder_seq_forward.1} parent=1 // pred_check
      _
    $region51: #{decoder_seq_forward.1} parent=1 // pred_check_branch
      %101 = sbr.rel (0) target = $region53
    $region52: #{decoder_seq_forward.1} parent=1 // pred_region
      %s103 = ssub.s32 16, 16
      %104 = vsyncadd [#allocation11], %s103
      %s106 = sshll.u32 [#allocation12], 4
      %s107 = int_to_ptr.vmem [resolvable:$true] %s106
      %109 = dma.hbm_to_vmem [thread:$0]  %s12, 16, %s107, [#allocation11]
    $region53: #{decoder_seq_forward.1} parent=1 // pred_fallthru
      _
    // Predicated region
    $region54: #{decoder_seq_forward.1} parent=1 // pred_check
      _
    $region55: #{decoder_seq_forward.1} parent=1 // pred_check_branch
      %111 = sbr.rel (0) target = $region57
    $region56: #{decoder_seq_forward.1} parent=1 // pred_region
      %112 = dma.done [#allocation3], 4096
    $region57: #{decoder_seq_forward.1} parent=1 // pred_fallthru
      _
    // Predicated region
    $region58: #{decoder_seq_forward.1} parent=1 // pred_check
      _
    $region59: #{decoder_seq_forward.1} parent=1 // pred_check_branch
      %114 = sbr.rel (0) target = $region61
    $region60: #{decoder_seq_forward.1} parent=1 // pred_region
      %115 = dma.done [#allocation5], 32
    $region61: #{decoder_seq_forward.1} parent=1 // pred_fallthru
      _
    // Predicated region
    $region62: #{decoder_seq_forward.1} parent=1 // pred_check
      _
    $region63: #{decoder_seq_forward.1} parent=1 // pred_check_branch
      %117 = sbr.rel (0) target = $region65
    $region64: #{decoder_seq_forward.1} parent=1 // pred_region
      %118 = dma.done [#allocation5], 2048
    $region65: #{decoder_seq_forward.1} parent=1 // pred_fallthru
      _
    // Predicated region
    $region66: #{decoder_seq_forward.1} parent=1 // pred_check
      _
    $region67: #{decoder_seq_forward.1} parent=1 // pred_check_branch
      %120 = sbr.rel (0) target = $region69
    $region68: #{decoder_seq_forward.1} parent=1 // pred_region
      %121 = dma.done [#allocation8], 768
    $region69: #{decoder_seq_forward.1} parent=1 // pred_fallthru
      _
    // Predicated region
    $region70: #{decoder_seq_forward.1} parent=1 // pred_check
      _
    $region71: #{decoder_seq_forward.1} parent=1 // pred_check_branch
      %123 = sbr.rel (0) target = $region73
    $region72: #{decoder_seq_forward.1} parent=1 // pred_region
      %124 = dma.done [#allocation8], 16
    $region73: #{decoder_seq_forward.1} parent=1 // pred_fallthru
      _
    // Predicated region
    $region74: #{decoder_seq_forward.1} parent=1 // pred_check
      _
    $region75: #{decoder_seq_forward.1} parent=1 // pred_check_branch
      %126 = sbr.rel (0) target = $region77
    $region76: #{decoder_seq_forward.1} parent=1 // pred_region
      %127 = dma.done [#allocation11], 32
    $region77: #{decoder_seq_forward.1} parent=1 // pred_fallthru
      _
    // Predicated region
    $region78: #{decoder_seq_forward.1} parent=1 // pred_check
      _
    $region79: #{decoder_seq_forward.1} parent=1 // pred_check_branch
      %129 = sbr.rel (0) target = $region81
    $region80: #{decoder_seq_forward.1} parent=1 // pred_region
      %130 = dma.done [#allocation11], 16
    $region81: #{decoder_seq_forward.1} parent=1 // pred_fallthru
      _
    %v132 = vld [vmem:[%s0] sm:$0x3]
    %v133 = vpack.c.bf16 %v132, %v132
    %v134 = vld [vmem:[%s1] sm:$0xff]
    %v135 = vld [vmem:[%s1 + $0x8] sm:$0x11]
    %v136 = vld [vmem:[%s2] sm:$0x3]
    %v138 = vlaneseq
    %v139 = vshrl.u32 %v138, 7
    %v140 = vsub.s32 0, %v139
    %v141 = vrot.slane %v136, %v140
    %v142 = vlaneseq
    %v143 = vshrl.u32 %v142, 7
    %v144 = vsub.s32 1, %v143
    %v145 = vrot.slane %v136, %v144
    %v150 = vunpack.c.l.b16 %v134
    %v151 = vunpack.c.h.b16 %v134
    %v152 = vunpack.c.l.b16 %v135
    %v153 = vunpack.c.h.b16 %v135
    %v154 = vpack.c.b16 %v152, %v150
    %v155 = vpack.c.b16 %v153, %v151
    %vm156 = vcmask 80896
    %v158 = vsel %vm156, %v133, 0
    %vm160 = vcmask 1044480
    %v162 = vsel %vm160, %v154, 0
    %v165 = vsel %vm160, %v155, 0
    %167 = vmatprep.subr.bf16.mxu0 0
    %168 = vmatpush1.bf16.msra.mxu0 0
    %169 = vmatprep.subr.bf16.mxu0 0
    %170 = vmatpush1.bf16.msra.mxu0 0
    %171 = vmatprep.subr.bf16.mxu0 0
    %172 = vmatpush1.bf16.msra.mxu0 0
    %173 = vmatprep.subr.bf16.mxu0 0
    %174 = vmatpush1.bf16.msra.mxu0 0
    %175 = vmatprep.subr.bf16.mxu0 0
    %176 = vmatpush1.bf16.msra.mxu0 0
    %177 = vmatprep.subr.bf16.mxu0 0
    %178 = vmatpush1.bf16.msra.mxu0 0
    %179 = vmatprep.subr.bf16.mxu0 0
    %180 = vmatpush1.bf16.msra.mxu0 0
    %181 = vmatprep.subr.bf16.mxu0 %v165
    %182 = vmatpush1.bf16.msra.mxu0 %v162
    %183 = vmatprep.subr.bf16.mxu0 0
    %184 = vmatpush2.bf16.msra.mxu0 0
    %185 = vmatprep.subr.bf16.mxu0 0
    %186 = vmatpush2.bf16.msra.mxu0 0
    %187 = vmatprep.subr.bf16.mxu0 0
    %188 = vmatpush2.bf16.msra.mxu0 0
    %189 = vmatprep.subr.bf16.mxu0 0
    %190 = vmatpush2.bf16.msra.mxu0 0
    %191 = vmatprep.subr.bf16.mxu0 0
    %192 = vmatpush2.bf16.msra.mxu0 0
    %193 = vmatprep.subr.bf16.mxu0 0
    %194 = vmatpush2.bf16.msra.mxu0 0
    %195 = vmatprep.subr.bf16.mxu0 0
    %196 = vmatpush2.bf16.msra.mxu0 0
    %197 = vmatprep.subr.bf16.mxu0 0
    %198 = vmatpush2.bf16.msra.mxu0 0
    %199 = vmatprep.mubr.bf16.mxu0 0
    %200 = vmatmul.mubr.bf16.gmra.mxu0 %v158
    %v201 = vpop.f32.mrf.mxu0
    %v202 = vadd.f32 %v141, %v201
    %v203 = vpop.f32.mrf.mxu0
    %v204 = vadd.f32 %v145, %v203
    %v205 = vpop.f32.mrf.mxu0
    %v206 = vpop.f32.mrf.mxu0
    %207 = vdwg.mxu0
    %v208 = vmax.f32 %v202, 0.0
    %v209 = vmax.f32 %v204, 0.0
    %v210 = vpack.c.bf16 %v208, %v208
    %v211 = vpack.c.bf16 %v209, %v209
    %v212 = vld [vmem:[#allocation2] sm:$0xff]
    %v213 = vld [vmem:[#allocation2 + $0x8] sm:$0xff]
    %v214 = vld [vmem:[#allocation2 + $0x10] sm:$0xff]
    %v215 = vld [vmem:[#allocation2 + $0x18] sm:$0xff]
    %v216 = vld [vmem:[#allocation2 + $0x20] sm:$0xff]
    %v217 = vld [vmem:[#allocation2 + $0x28] sm:$0xff]
    %v218 = vld [vmem:[#allocation2 + $0x30] sm:$0xff]
    %v219 = vld [vmem:[#allocation2 + $0x38] sm:$0xff]
    %v220 = vld [vmem:[#allocation2 + $0x40] sm:$0xff]
    %v221 = vld [vmem:[#allocation2 + $0x48] sm:$0xff]
    %v222 = vld [vmem:[#allocation2 + $0x50] sm:$0xff]
    %v223 = vld [vmem:[#allocation2 + $0x58] sm:$0xff]
    %v224 = vld [vmem:[#allocation2 + $0x60] sm:$0xff]
    %v225 = vld [vmem:[#allocation2 + $0x68] sm:$0xff]
    %v226 = vld [vmem:[#allocation2 + $0x70] sm:$0xff]
    %v227 = vld [vmem:[#allocation2 + $0x78] sm:$0xff]
    %v228 = vld [vmem:[#allocation2 + $0x80] sm:$0xff]
    %v229 = vld [vmem:[#allocation2 + $0x88] sm:$0xff]
    %v230 = vld [vmem:[#allocation2 + $0x90] sm:$0xff]
    %v231 = vld [vmem:[#allocation2 + $0x98] sm:$0xff]
    %v232 = vld [vmem:[#allocation2 + $0xa0] sm:$0xff]
    %v233 = vld [vmem:[#allocation2 + $0xa8] sm:$0xff]
    %v234 = vld [vmem:[#allocation2 + $0xb0] sm:$0xff]
    %v235 = vld [vmem:[#allocation2 + $0xb8] sm:$0xff]
    %v236 = vld [vmem:[#allocation2 + $0xc0] sm:$0xff]
    %v237 = vld [vmem:[#allocation2 + $0xc8] sm:$0xff]
    %v238 = vld [vmem:[#allocation2 + $0xd0] sm:$0xff]
    %v239 = vld [vmem:[#allocation2 + $0xd8] sm:$0xff]
    %v240 = vld [vmem:[#allocation2 + $0xe0] sm:$0xff]
    %v241 = vld [vmem:[#allocation2 + $0xe8] sm:$0xff]
    %v242 = vld [vmem:[#allocation2 + $0xf0] sm:$0xff]
    %v243 = vld [vmem:[#allocation2 + $0xf8] sm:$0xff]
    %v244 = vld [vmem:[#allocation4] sm:$0x3]
    %v246 = vlaneseq
    %v247 = vshrl.u32 %v246, 7
    %v248 = vsub.s32 0, %v247
    %v249 = vrot.slane %v244, %v248
    %v250 = vlaneseq
    %v251 = vshrl.u32 %v250, 7
    %v252 = vsub.s32 1, %v251
    %v253 = vrot.slane %v244, %v252
    %v288 = vunpack.c.l.b16 %v212
    %v289 = vunpack.c.h.b16 %v212
    %v290 = vunpack.c.l.b16 %v213
    %v291 = vunpack.c.h.b16 %v213
    %v292 = vunpack.c.l.b16 %v214
    %v293 = vunpack.c.h.b16 %v214
    %v294 = vunpack.c.l.b16 %v215
    %v295 = vunpack.c.h.b16 %v215
    %v296 = vunpack.c.l.b16 %v216
    %v297 = vunpack.c.h.b16 %v216
    %v298 = vunpack.c.l.b16 %v217
    %v299 = vunpack.c.h.b16 %v217
    %v300 = vunpack.c.l.b16 %v218
    %v301 = vunpack.c.h.b16 %v218
    %v302 = vunpack.c.l.b16 %v219
    %v303 = vunpack.c.h.b16 %v219
    %v304 = vunpack.c.l.b16 %v220
    %v305 = vunpack.c.h.b16 %v220
    %v306 = vunpack.c.l.b16 %v221
    %v307 = vunpack.c.h.b16 %v221
    %v308 = vunpack.c.l.b16 %v222
    %v309 = vunpack.c.h.b16 %v222
    %v310 = vunpack.c.l.b16 %v223
    %v311 = vunpack.c.h.b16 %v223
    %v312 = vunpack.c.l.b16 %v224
    %v313 = vunpack.c.h.b16 %v224
    %v314 = vunpack.c.l.b16 %v225
    %v315 = vunpack.c.h.b16 %v225
    %v316 = vunpack.c.l.b16 %v226
    %v317 = vunpack.c.h.b16 %v226
    %v318 = vunpack.c.l.b16 %v227
    %v319 = vunpack.c.h.b16 %v227
    %v320 = vunpack.c.l.b16 %v228
    %v321 = vunpack.c.h.b16 %v228
    %v322 = vunpack.c.l.b16 %v229
    %v323 = vunpack.c.h.b16 %v229
    %v324 = vunpack.c.l.b16 %v230
    %v325 = vunpack.c.h.b16 %v230
    %v326 = vunpack.c.l.b16 %v231
    %v327 = vunpack.c.h.b16 %v231
    %v328 = vunpack.c.l.b16 %v232
    %v329 = vunpack.c.h.b16 %v232
    %v330 = vunpack.c.l.b16 %v233
    %v331 = vunpack.c.h.b16 %v233
    %v332 = vunpack.c.l.b16 %v234
    %v333 = vunpack.c.h.b16 %v234
    %v334 = vunpack.c.l.b16 %v235
    %v335 = vunpack.c.h.b16 %v235
    %v336 = vunpack.c.l.b16 %v236
    %v337 = vunpack.c.h.b16 %v236
    %v338 = vunpack.c.l.b16 %v237
    %v339 = vunpack.c.h.b16 %v237
    %v340 = vunpack.c.l.b16 %v238
    %v341 = vunpack.c.h.b16 %v238
    %v342 = vunpack.c.l.b16 %v239
    %v343 = vunpack.c.h.b16 %v239
    %v344 = vunpack.c.l.b16 %v240
    %v345 = vunpack.c.h.b16 %v240
    %v346 = vunpack.c.l.b16 %v241
    %v347 = vunpack.c.h.b16 %v241
    %v348 = vunpack.c.l.b16 %v242
    %v349 = vunpack.c.h.b16 %v242
    %v350 = vunpack.c.l.b16 %v243
    %v351 = vunpack.c.h.b16 %v243
    %v352 = vpack.c.b16 %v290, %v288
    %v353 = vpack.c.b16 %v291, %v289
    %v354 = vpack.c.b16 %v294, %v292
    %v355 = vpack.c.b16 %v295, %v293
    %v356 = vpack.c.b16 %v298, %v296
    %v357 = vpack.c.b16 %v299, %v297
    %v358 = vpack.c.b16 %v302, %v300
    %v359 = vpack.c.b16 %v303, %v301
    %v360 = vpack.c.b16 %v306, %v304
    %v361 = vpack.c.b16 %v307, %v305
    %v362 = vpack.c.b16 %v310, %v308
    %v363 = vpack.c.b16 %v311, %v309
    %v364 = vpack.c.b16 %v314, %v312
    %v365 = vpack.c.b16 %v315, %v313
    %v366 = vpack.c.b16 %v318, %v316
    %v367 = vpack.c.b16 %v319, %v317
    %v368 = vpack.c.b16 %v322, %v320
    %v369 = vpack.c.b16 %v323, %v321
    %v370 = vpack.c.b16 %v326, %v324
    %v371 = vpack.c.b16 %v327, %v325
    %v372 = vpack.c.b16 %v330, %v328
    %v373 = vpack.c.b16 %v331, %v329
    %v374 = vpack.c.b16 %v334, %v332
    %v375 = vpack.c.b16 %v335, %v333
    %v376 = vpack.c.b16 %v338, %v336
    %v377 = vpack.c.b16 %v339, %v337
    %v378 = vpack.c.b16 %v342, %v340
    %v379 = vpack.c.b16 %v343, %v341
    %v380 = vpack.c.b16 %v346, %v344
    %v381 = vpack.c.b16 %v347, %v345
    %v382 = vpack.c.b16 %v350, %v348
    %v383 = vpack.c.b16 %v351, %v349
    %416 = vmatprep.subr.bf16.mxu0 %v367
    %417 = vmatpush1.bf16.msra.mxu0 %v366
    %418 = vmatprep.subr.bf16.mxu0 %v365
    %419 = vmatpush1.bf16.msra.mxu0 %v364
    %420 = vmatprep.subr.bf16.mxu0 %v363
    %421 = vmatpush1.bf16.msra.mxu0 %v362
    %422 = vmatprep.subr.bf16.mxu0 %v361
    %423 = vmatpush1.bf16.msra.mxu0 %v360
    %424 = vmatprep.subr.bf16.mxu0 %v359
    %425 = vmatpush1.bf16.msra.mxu0 %v358
    %426 = vmatprep.subr.bf16.mxu0 %v357
    %427 = vmatpush1.bf16.msra.mxu0 %v356
    %428 = vmatprep.subr.bf16.mxu0 %v355
    %429 = vmatpush1.bf16.msra.mxu0 %v354
    %430 = vmatprep.subr.bf16.mxu0 %v353
    %431 = vmatpush1.bf16.msra.mxu0 %v352
    %432 = vmatprep.subr.bf16.mxu0 %v383
    %433 = vmatpush2.bf16.msra.mxu0 %v382
    %434 = vmatprep.subr.bf16.mxu0 %v381
    %435 = vmatpush2.bf16.msra.mxu0 %v380
    %436 = vmatprep.subr.bf16.mxu0 %v379
    %437 = vmatpush2.bf16.msra.mxu0 %v378
    %438 = vmatprep.subr.bf16.mxu0 %v377
    %439 = vmatpush2.bf16.msra.mxu0 %v376
    %440 = vmatprep.subr.bf16.mxu0 %v375
    %441 = vmatpush2.bf16.msra.mxu0 %v374
    %442 = vmatprep.subr.bf16.mxu0 %v373
    %443 = vmatpush2.bf16.msra.mxu0 %v372
    %444 = vmatprep.subr.bf16.mxu0 %v371
    %445 = vmatpush2.bf16.msra.mxu0 %v370
    %446 = vmatprep.subr.bf16.mxu0 %v369
    %447 = vmatpush2.bf16.msra.mxu0 %v368
    %448 = vmatprep.mubr.bf16.mxu0 %v211
    %449 = vmatmul.mubr.bf16.gmra.mxu0 %v210
    %v450 = vpop.f32.mrf.mxu0
    %v451 = vadd.f32 %v249, %v450
    %v452 = vpop.f32.mrf.mxu0
    %v453 = vadd.f32 %v253, %v452
    %v454 = vpop.f32.mrf.mxu0
    %v455 = vpop.f32.mrf.mxu0
    %456 = vdwg.mxu0
    %v457 = vmax.f32 %v451, 0.0
    %v458 = vmax.f32 %v453, 0.0
    %v459 = vpack.c.bf16 %v457, %v457
    %v460 = vpack.c.bf16 %v458, %v458
    %v461 = vld [vmem:[#allocation6] sm:$0xf]
    %v462 = vld [vmem:[#allocation6 + $0x4] sm:$0xf]
    %v463 = vld [vmem:[#allocation6 + $0x8] sm:$0xf]
    %v464 = vld [vmem:[#allocation6 + $0xc] sm:$0xf]
    %v465 = vld [vmem:[#allocation6 + $0x10] sm:$0xf]
    %v466 = vld [vmem:[#allocation6 + $0x14] sm:$0xf]
    %v467 = vld [vmem:[#allocation6 + $0x18] sm:$0xf]
    %v468 = vld [vmem:[#allocation6 + $0x1c] sm:$0xf]
    %v469 = vld [vmem:[#allocation6 + $0x20] sm:$0xf]
    %v470 = vld [vmem:[#allocation6 + $0x24] sm:$0xf]
    %v471 = vld [vmem:[#allocation6 + $0x28] sm:$0xf]
    %v472 = vld [vmem:[#allocation6 + $0x2c] sm:$0xf]
    %v473 = vld [vmem:[#allocation6 + $0x30] sm:$0xf]
    %v474 = vld [vmem:[#allocation6 + $0x34] sm:$0xf]
    %v475 = vld [vmem:[#allocation6 + $0x38] sm:$0xf]
    %v476 = vld [vmem:[#allocation6 + $0x3c] sm:$0xf]
    %v477 = vld [vmem:[#allocation6 + $0x40] sm:$0xf]
    %v478 = vld [vmem:[#allocation6 + $0x44] sm:$0xf]
    %v479 = vld [vmem:[#allocation6 + $0x48] sm:$0xf]
    %v480 = vld [vmem:[#allocation6 + $0x4c] sm:$0xf]
    %v481 = vld [vmem:[#allocation6 + $0x50] sm:$0xf]
    %v482 = vld [vmem:[#allocation6 + $0x54] sm:$0xf]
    %v483 = vld [vmem:[#allocation6 + $0x58] sm:$0xf]
    %v484 = vld [vmem:[#allocation6 + $0x5c] sm:$0xf]
    %v485 = vld [vmem:[#allocation6 + $0x60] sm:$0xf]
    %v486 = vld [vmem:[#allocation6 + $0x64] sm:$0xf]
    %v487 = vld [vmem:[#allocation6 + $0x68] sm:$0xf]
    %v488 = vld [vmem:[#allocation6 + $0x6c] sm:$0xf]
    %v489 = vld [vmem:[#allocation6 + $0x70] sm:$0xf]
    %v490 = vld [vmem:[#allocation6 + $0x74] sm:$0xf]
    %v491 = vld [vmem:[#allocation6 + $0x78] sm:$0xf]
    %v492 = vld [vmem:[#allocation6 + $0x7c] sm:$0xf]
    %v493 = vld [vmem:[%s6] sm:$0x1]
    %v495 = vlaneseq
    %v496 = vshrl.u32 %v495, 7
    %v497 = vsub.s32 0, %v496
    %v498 = vrot.slane %v493, %v497
    %v532 = vunpack.c.l.b16 %v461
    %v533 = vunpack.c.l.b16 %v462
    %v534 = vunpack.c.l.b16 %v463
    %v535 = vunpack.c.l.b16 %v464
    %v536 = vunpack.c.l.b16 %v465
    %v537 = vunpack.c.l.b16 %v466
    %v538 = vunpack.c.l.b16 %v467
    %v539 = vunpack.c.l.b16 %v468
    %v540 = vunpack.c.l.b16 %v469
    %v541 = vunpack.c.l.b16 %v470
    %v542 = vunpack.c.l.b16 %v471
    %v543 = vunpack.c.l.b16 %v472
    %v544 = vunpack.c.l.b16 %v473
    %v545 = vunpack.c.l.b16 %v474
    %v546 = vunpack.c.l.b16 %v475
    %v547 = vunpack.c.l.b16 %v476
    %v548 = vunpack.c.l.b16 %v477
    %v549 = vunpack.c.l.b16 %v478
    %v550 = vunpack.c.l.b16 %v479
    %v551 = vunpack.c.l.b16 %v480
    %v552 = vunpack.c.l.b16 %v481
    %v553 = vunpack.c.l.b16 %v482
    %v554 = vunpack.c.l.b16 %v483
    %v555 = vunpack.c.l.b16 %v484
    %v556 = vunpack.c.l.b16 %v485
    %v557 = vunpack.c.l.b16 %v486
    %v558 = vunpack.c.l.b16 %v487
    %v559 = vunpack.c.l.b16 %v488
    %v560 = vunpack.c.l.b16 %v489
    %v561 = vunpack.c.l.b16 %v490
    %v562 = vunpack.c.l.b16 %v491
    %v563 = vunpack.c.l.b16 %v492
    %v564 = vpack.c.b16 %v533, %v532
    %v565 = vpack.c.b16 %v535, %v534
    %v566 = vpack.c.b16 %v537, %v536
    %v567 = vpack.c.b16 %v539, %v538
    %v568 = vpack.c.b16 %v541, %v540
    %v569 = vpack.c.b16 %v543, %v542
    %v570 = vpack.c.b16 %v545, %v544
    %v571 = vpack.c.b16 %v547, %v546
    %v572 = vpack.c.b16 %v549, %v548
    %v573 = vpack.c.b16 %v551, %v550
    %v574 = vpack.c.b16 %v553, %v552
    %v575 = vpack.c.b16 %v555, %v554
    %v576 = vpack.c.b16 %v557, %v556
    %v577 = vpack.c.b16 %v559, %v558
    %v578 = vpack.c.b16 %v561, %v560
    %v579 = vpack.c.b16 %v563, %v562
    %596 = vmatprep.subr.bf16.mxu0 0
    %597 = vmatpush1.bf16.msra.mxu0 %v571
    %598 = vmatprep.subr.bf16.mxu0 0
    %599 = vmatpush1.bf16.msra.mxu0 %v570
    %600 = vmatprep.subr.bf16.mxu0 0
    %601 = vmatpush1.bf16.msra.mxu0 %v569
    %602 = vmatprep.subr.bf16.mxu0 0
    %603 = vmatpush1.bf16.msra.mxu0 %v568
    %604 = vmatprep.subr.bf16.mxu0 0
    %605 = vmatpush1.bf16.msra.mxu0 %v567
    %606 = vmatprep.subr.bf16.mxu0 0
    %607 = vmatpush1.bf16.msra.mxu0 %v566
    %608 = vmatprep.subr.bf16.mxu0 0
    %609 = vmatpush1.bf16.msra.mxu0 %v565
    %610 = vmatprep.subr.bf16.mxu0 0
    %611 = vmatpush1.bf16.msra.mxu0 %v564
    %612 = vmatprep.subr.bf16.mxu0 0
    %613 = vmatpush2.bf16.msra.mxu0 %v579
    %614 = vmatprep.subr.bf16.mxu0 0
    %615 = vmatpush2.bf16.msra.mxu0 %v578
    %616 = vmatprep.subr.bf16.mxu0 0
    %617 = vmatpush2.bf16.msra.mxu0 %v577
    %618 = vmatprep.subr.bf16.mxu0 0
    %619 = vmatpush2.bf16.msra.mxu0 %v576
    %620 = vmatprep.subr.bf16.mxu0 0
    %621 = vmatpush2.bf16.msra.mxu0 %v575
    %622 = vmatprep.subr.bf16.mxu0 0
    %623 = vmatpush2.bf16.msra.mxu0 %v574
    %624 = vmatprep.subr.bf16.mxu0 0
    %625 = vmatpush2.bf16.msra.mxu0 %v573
    %626 = vmatprep.subr.bf16.mxu0 0
    %627 = vmatpush2.bf16.msra.mxu0 %v572
    %628 = vmatprep.mubr.bf16.mxu0 %v460
    %629 = vmatmul.mubr.bf16.gmra.mxu0 %v459
    %v630 = vpop.f32.mrf.mxu0
    %v631 = vadd.f32 %v498, %v630
    %v632 = vpop.f32.mrf.mxu0
    %v633 = vpop.f32.mrf.mxu0
    %v634 = vpop.f32.mrf.mxu0
    %635 = vdwg.mxu0
    %v636 = vmax.f32 %v631, 0.0
    %v638 = vrot.slane %v636, 6
    %639 = vrot.lane.b32.xlu0 %v638, 96
    %v640 = vpop.permute.xlu0 %639
    %v642 = vrot.slane %v636, 4
    %643 = vrot.lane.b32.xlu0 %v642, 64
    %v644 = vpop.permute.xlu0 %643
    %v646 = vrot.slane %v636, 2
    %647 = vrot.lane.b32.xlu0 %v646, 32
    %v648 = vpop.permute.xlu0 %647
    %vm650 = vcmask 1041408
    %v651 = vsel %vm650, %v636, %v640
    %vm652 = vcmask 1043456
    %v653 = vsel %vm652, %v651, %v644
    %vm654 = vcmask 1045504
    %v655 = vsel %vm654, %v653, %v648
    %v657 = vrot.slane %v655, 6
    %v659 = vsel %vm650, 0.0, %v657
    %v660 = vrot.slane %v655, 2
    %v662 = vsel %vm654, %v660, 0.0
    %664 = vrot.lane.b32.xlu0 %v659, 32
    %v665 = vpop.permute.xlu0 %664
    %668 = vrot.lane.b32.xlu0 %v662, 64
    %v669 = vpop.permute.xlu0 %668
    %vm671 = vcmask 261120
    %v672 = vsel %vm671, %v655, %v665
    %vm673 = vcmask 523264
    %v674 = vsel %vm673, %v672, %v669
    %v675 = vpack.c.bf16 %v674, %v674
    %v676 = vld [vmem:[#allocation7] sm:$0xf]
    %v677 = vld [vmem:[#allocation7 + $0x4] sm:$0xf]
    %v678 = vld [vmem:[#allocation7 + $0x8] sm:$0xf]
    %v679 = vld [vmem:[#allocation7 + $0xc] sm:$0xf]
    %v680 = vld [vmem:[#allocation7 + $0x10] sm:$0xf]
    %v681 = vld [vmem:[#allocation7 + $0x14] sm:$0xf]
    %v682 = vld [vmem:[#allocation7 + $0x18] sm:$0xf]
    %v683 = vld [vmem:[#allocation7 + $0x1c] sm:$0xf]
    %v684 = vld [vmem:[#allocation7 + $0x20] sm:$0xf]
    %v685 = vld [vmem:[#allocation7 + $0x24] sm:$0xf]
    %v686 = vld [vmem:[#allocation7 + $0x28] sm:$0xf]
    %v687 = vld [vmem:[#allocation7 + $0x2c] sm:$0xf]
    %v688 = vld [vmem:[#allocation9] sm:$0x1]
    %v690 = vlaneseq
    %v691 = vshrl.u32 %v690, 7
    %v692 = vsub.s32 0, %v691
    %v693 = vrot.slane %v688, %v692
    %v707 = vunpack.c.l.b16 %v676
    %v708 = vunpack.c.l.b16 %v677
    %v709 = vunpack.c.l.b16 %v678
    %v710 = vunpack.c.l.b16 %v679
    %v711 = vunpack.c.l.b16 %v680
    %v712 = vunpack.c.l.b16 %v681
    %v713 = vunpack.c.l.b16 %v682
    %v714 = vunpack.c.l.b16 %v683
    %v715 = vunpack.c.l.b16 %v684
    %v716 = vunpack.c.l.b16 %v685
    %v717 = vunpack.c.l.b16 %v686
    %v718 = vunpack.c.l.b16 %v687
    %v719 = vpack.c.b16 %v708, %v707
    %v720 = vpack.c.b16 %v710, %v709
    %v721 = vpack.c.b16 %v712, %v711
    %v722 = vpack.c.b16 %v714, %v713
    %v723 = vpack.c.b16 %v716, %v715
    %v724 = vpack.c.b16 %v718, %v717
    %vm731 = vcmask 785408
    %v733 = vsel %vm731, %v675, 0
    %735 = vmatprep.subr.bf16.mxu0 0
    %736 = vmatpush1.bf16.msra.mxu0 0
    %737 = vmatprep.subr.bf16.mxu0 0
    %738 = vmatpush1.bf16.msra.mxu0 0
    %739 = vmatprep.subr.bf16.mxu0 0
    %740 = vmatpush1.bf16.msra.mxu0 %v724
    %741 = vmatprep.subr.bf16.mxu0 0
    %742 = vmatpush1.bf16.msra.mxu0 %v723
    %743 = vmatprep.subr.bf16.mxu0 0
    %744 = vmatpush1.bf16.msra.mxu0 %v722
    %745 = vmatprep.subr.bf16.mxu0 0
    %746 = vmatpush1.bf16.msra.mxu0 %v721
    %747 = vmatprep.subr.bf16.mxu0 0
    %748 = vmatpush1.bf16.msra.mxu0 %v720
    %749 = vmatprep.subr.bf16.mxu0 0
    %750 = vmatpush1.bf16.msra.mxu0 %v719
    %751 = vmatprep.subr.bf16.mxu0 0
    %752 = vmatpush2.bf16.msra.mxu0 0
    %753 = vmatprep.subr.bf16.mxu0 0
    %754 = vmatpush2.bf16.msra.mxu0 0
    %755 = vmatprep.subr.bf16.mxu0 0
    %756 = vmatpush2.bf16.msra.mxu0 0
    %757 = vmatprep.subr.bf16.mxu0 0
    %758 = vmatpush2.bf16.msra.mxu0 0
    %759 = vmatprep.subr.bf16.mxu0 0
    %760 = vmatpush2.bf16.msra.mxu0 0
    %761 = vmatprep.subr.bf16.mxu0 0
    %762 = vmatpush2.bf16.msra.mxu0 0
    %763 = vmatprep.subr.bf16.mxu0 0
    %764 = vmatpush2.bf16.msra.mxu0 0
    %765 = vmatprep.subr.bf16.mxu0 0
    %766 = vmatpush2.bf16.msra.mxu0 0
    %767 = vmatprep.mubr.bf16.mxu0 0
    %768 = vmatmul.mubr.bf16.gmra.mxu0 %v733
    %v769 = vpop.f32.mrf.mxu0
    %v770 = vadd.f32 %v693, %v769
    %v771 = vpop.f32.mrf.mxu0
    %v772 = vpop.f32.mrf.mxu0
    %v773 = vpop.f32.mrf.mxu0
    %774 = vdwg.mxu0
    %v775 = vmax.f32 %v770, 0.0
    %v777 = vrot.slane %v775, 6
    %778 = vrot.lane.b32.xlu0 %v777, 64
    %v779 = vpop.permute.xlu0 %778
    %v781 = vsel %vm650, 0.0, %v779
    %v782 = vrot.slane %v775, 2
    %v784 = vsel %vm654, %v782, 0.0
    %785 = vrot.lane.b32.xlu0 %v775, 64
    %v786 = vpop.permute.xlu0 %785
    %789 = vrot.lane.b32.xlu0 %v784, 64
    %v790 = vpop.permute.xlu0 %789
    %792 = vrot.lane.b32.xlu0 %v781, 64
    %v793 = vpop.permute.xlu0 %792
    %795 = vrot.lane.b32.xlu0 %v790, 64
    %v796 = vpop.permute.xlu0 %795
    %v798 = vsel %vm673, %v775, %v793
    %v799 = vpack.c.bf16 %v786, %v798
    %v800 = vpack.c.bf16 %v796, %v786
    %v801 = vld [vmem:[%s9] sm:$0xff]
    %v802 = vld [vmem:[%s9 + $0x8] sm:$0xff]
    %v803 = vld [vmem:[%s9 + $0x10] sm:$0xff]
    %v804 = vld [vmem:[%s9 + $0x18] sm:$0xff]
    %v805 = vld [vmem:[%s9 + $0x20] sm:$0xff]
    %v806 = vld [vmem:[%s9 + $0x28] sm:$0xff]
    %v807 = vld [vmem:[%s9 + $0x30] sm:$0xff]
    %v808 = vld [vmem:[%s9 + $0x38] sm:$0xff]
    %v809 = vld [vmem:[%s9 + $0x40] sm:$0xff]
    %v810 = vld [vmem:[%s9 + $0x48] sm:$0xff]
    %v811 = vld [vmem:[%s9 + $0x50] sm:$0xff]
    %v812 = vld [vmem:[%s9 + $0x58] sm:$0xff]
    %v813 = vld [vmem:[%s9 + $0x60] sm:$0xff]
    %v814 = vld [vmem:[%s9 + $0x68] sm:$0xff]
    %v815 = vld [vmem:[%s9 + $0x70] sm:$0xff]
    %v816 = vld [vmem:[%s9 + $0x78] sm:$0xff]
    %v817 = vld [vmem:[%s9 + $0x80] sm:$0xff]
    %v818 = vld [vmem:[%s9 + $0x88] sm:$0xff]
    %v819 = vld [vmem:[%s9 + $0x90] sm:$0xff]
    %v820 = vld [vmem:[%s9 + $0x98] sm:$0xff]
    %v821 = vld [vmem:[%s9 + $0xa0] sm:$0xff]
    %v822 = vld [vmem:[%s9 + $0xa8] sm:$0xff]
    %v823 = vld [vmem:[%s9 + $0xb0] sm:$0xff]
    %v824 = vld [vmem:[%s9 + $0xb8] sm:$0xff]
    %v825 = vld [vmem:[#allocation10] sm:$0x3]
    %v827 = vlaneseq
    %v828 = vshrl.u32 %v827, 7
    %v829 = vsub.s32 0, %v828
    %v830 = vrot.slane %v825, %v829
    %v831 = vlaneseq
    %v832 = vshrl.u32 %v831, 7
    %v833 = vsub.s32 1, %v832
    %v834 = vrot.slane %v825, %v833
    %v861 = vunpack.c.l.b16 %v801
    %v862 = vunpack.c.h.b16 %v801
    %v863 = vunpack.c.l.b16 %v802
    %v864 = vunpack.c.h.b16 %v802
    %v865 = vunpack.c.l.b16 %v803
    %v866 = vunpack.c.h.b16 %v803
    %v867 = vunpack.c.l.b16 %v804
    %v868 = vunpack.c.h.b16 %v804
    %v869 = vunpack.c.l.b16 %v805
    %v870 = vunpack.c.h.b16 %v805
    %v871 = vunpack.c.l.b16 %v806
    %v872 = vunpack.c.h.b16 %v806
    %v873 = vunpack.c.l.b16 %v807
    %v874 = vunpack.c.h.b16 %v807
    %v875 = vunpack.c.l.b16 %v808
    %v876 = vunpack.c.h.b16 %v808
    %v877 = vunpack.c.l.b16 %v809
    %v878 = vunpack.c.h.b16 %v809
    %v879 = vunpack.c.l.b16 %v810
    %v880 = vunpack.c.h.b16 %v810
    %v881 = vunpack.c.l.b16 %v811
    %v882 = vunpack.c.h.b16 %v811
    %v883 = vunpack.c.l.b16 %v812
    %v884 = vunpack.c.h.b16 %v812
    %v885 = vunpack.c.l.b16 %v813
    %v886 = vunpack.c.h.b16 %v813
    %v887 = vunpack.c.l.b16 %v814
    %v888 = vunpack.c.h.b16 %v814
    %v889 = vunpack.c.l.b16 %v815
    %v890 = vunpack.c.h.b16 %v815
    %v891 = vunpack.c.l.b16 %v816
    %v892 = vunpack.c.h.b16 %v816
    %v893 = vunpack.c.l.b16 %v817
    %v894 = vunpack.c.h.b16 %v817
    %v895 = vunpack.c.l.b16 %v818
    %v896 = vunpack.c.h.b16 %v818
    %v897 = vunpack.c.l.b16 %v819
    %v898 = vunpack.c.h.b16 %v819
    %v899 = vunpack.c.l.b16 %v820
    %v900 = vunpack.c.h.b16 %v820
    %v901 = vunpack.c.l.b16 %v821
    %v902 = vunpack.c.h.b16 %v821
    %v903 = vunpack.c.l.b16 %v822
    %v904 = vunpack.c.h.b16 %v822
    %v905 = vunpack.c.l.b16 %v823
    %v906 = vunpack.c.h.b16 %v823
    %v907 = vunpack.c.l.b16 %v824
    %v908 = vunpack.c.h.b16 %v824
    %v909 = vpack.c.b16 %v863, %v861
    %v910 = vpack.c.b16 %v864, %v862
    %v911 = vpack.c.b16 %v867, %v865
    %v912 = vpack.c.b16 %v868, %v866
    %v913 = vpack.c.b16 %v871, %v869
    %v914 = vpack.c.b16 %v872, %v870
    %v915 = vpack.c.b16 %v875, %v873
    %v916 = vpack.c.b16 %v876, %v874
    %v917 = vpack.c.b16 %v879, %v877
    %v918 = vpack.c.b16 %v880, %v878
    %v919 = vpack.c.b16 %v883, %v881
    %v920 = vpack.c.b16 %v884, %v882
    %v921 = vpack.c.b16 %v887, %v885
    %v922 = vpack.c.b16 %v888, %v886
    %v923 = vpack.c.b16 %v891, %v889
    %v924 = vpack.c.b16 %v892, %v890
    %v925 = vpack.c.b16 %v895, %v893
    %v926 = vpack.c.b16 %v896, %v894
    %v927 = vpack.c.b16 %v899, %v897
    %v928 = vpack.c.b16 %v900, %v898
    %v929 = vpack.c.b16 %v903, %v901
    %v930 = vpack.c.b16 %v904, %v902
    %v931 = vpack.c.b16 %v907, %v905
    %v932 = vpack.c.b16 %v908, %v906
    %v958 = vsel %vm673, %v800, 0
    %960 = vmatprep.subr.bf16.mxu0 %v924
    %961 = vmatpush1.bf16.msra.mxu0 %v923
    %962 = vmatprep.subr.bf16.mxu0 %v922
    %963 = vmatpush1.bf16.msra.mxu0 %v921
    %964 = vmatprep.subr.bf16.mxu0 %v920
    %965 = vmatpush1.bf16.msra.mxu0 %v919
    %966 = vmatprep.subr.bf16.mxu0 %v918
    %967 = vmatpush1.bf16.msra.mxu0 %v917
    %968 = vmatprep.subr.bf16.mxu0 %v916
    %969 = vmatpush1.bf16.msra.mxu0 %v915
    %970 = vmatprep.subr.bf16.mxu0 %v914
    %971 = vmatpush1.bf16.msra.mxu0 %v913
    %972 = vmatprep.subr.bf16.mxu0 %v912
    %973 = vmatpush1.bf16.msra.mxu0 %v911
    %974 = vmatprep.subr.bf16.mxu0 %v910
    %975 = vmatpush1.bf16.msra.mxu0 %v909
    %976 = vmatprep.subr.bf16.mxu0 0
    %977 = vmatpush2.bf16.msra.mxu0 0
    %978 = vmatprep.subr.bf16.mxu0 0
    %979 = vmatpush2.bf16.msra.mxu0 0
    %980 = vmatprep.subr.bf16.mxu0 0
    %981 = vmatpush2.bf16.msra.mxu0 0
    %982 = vmatprep.subr.bf16.mxu0 0
    %983 = vmatpush2.bf16.msra.mxu0 0
    %984 = vmatprep.subr.bf16.mxu0 %v932
    %985 = vmatpush2.bf16.msra.mxu0 %v931
    %986 = vmatprep.subr.bf16.mxu0 %v930
    %987 = vmatpush2.bf16.msra.mxu0 %v929
    %988 = vmatprep.subr.bf16.mxu0 %v928
    %989 = vmatpush2.bf16.msra.mxu0 %v927
    %990 = vmatprep.subr.bf16.mxu0 %v926
    %991 = vmatpush2.bf16.msra.mxu0 %v925
    %992 = vmatprep.mubr.bf16.mxu0 %v958
    %993 = vmatmul.mubr.bf16.gmra.mxu0 %v799
    %v994 = vpop.f32.mrf.mxu0
    %v995 = vadd.f32 %v830, %v994
    %v996 = vpop.f32.mrf.mxu0
    %v997 = vadd.f32 %v834, %v996
    %v998 = vpop.f32.mrf.mxu0
    %v999 = vadd.f32 %v830, %v998
    %v1000 = vpop.f32.mrf.mxu0
    %v1001 = vadd.f32 %v834, %v1000
    %1002 = vdwg.mxu0
    %v1003 = vmax.f32 %v995, 0.0
    %v1004 = vmax.f32 %v997, 0.0
    %v1005 = vmax.f32 %v999, 0.0
    %v1006 = vmax.f32 %v1001, 0.0
    %v1008 = vrot.slane %v1006, 6
    %v1010 = vsel %vm650, 0.0, %v1008
    %v1012 = vrot.slane %v1003, 2
    %v1014 = vsel %vm654, %v1012, 0.0
    %v1015 = vpack.c.bf16 %v1004, %v1003
    %v1016 = vpack.c.bf16 %v1003, %v1010
    %v1017 = vpack.c.bf16 %v1005, %v1004
    %v1018 = vpack.c.bf16 %v1006, %v1005
    %v1019 = vpack.c.bf16 %v1014, %v1006
    %v1020 = vld [vmem:[%s11] sm:$0xf]
    %v1021 = vld [vmem:[%s11 + $0x4] sm:$0xf]
    %v1022 = vld [vmem:[%s11 + $0x8] sm:$0xf]
    %v1023 = vld [vmem:[%s11 + $0xc] sm:$0xf]
    %v1024 = vld [vmem:[%s11 + $0x10] sm:$0xf]
    %v1025 = vld [vmem:[%s11 + $0x14] sm:$0xf]
    %v1026 = vld [vmem:[%s11 + $0x18] sm:$0xf]
    %v1027 = vld [vmem:[%s11 + $0x1c] sm:$0xf]
    %v1028 = vld [vmem:[%s11 + $0x20] sm:$0xf]
    %v1029 = vld [vmem:[%s11 + $0x24] sm:$0xf]
    %v1030 = vld [vmem:[%s11 + $0x28] sm:$0xf]
    %v1031 = vld [vmem:[%s11 + $0x2c] sm:$0xf]
    %v1032 = vld [vmem:[%s11 + $0x30] sm:$0xf]
    %v1033 = vld [vmem:[%s11 + $0x34] sm:$0xf]
    %v1034 = vld [vmem:[%s11 + $0x38] sm:$0xf]
    %v1035 = vld [vmem:[%s11 + $0x3c] sm:$0xf]
    %v1036 = vld [vmem:[%s11 + $0x40] sm:$0xf]
    %v1037 = vld [vmem:[%s11 + $0x44] sm:$0xf]
    %v1038 = vld [vmem:[%s11 + $0x48] sm:$0xf]
    %v1039 = vld [vmem:[%s11 + $0x4c] sm:$0xf]
    %v1040 = vld [vmem:[%s11 + $0x50] sm:$0xf]
    %v1041 = vld [vmem:[%s11 + $0x54] sm:$0xf]
    %v1042 = vld [vmem:[%s11 + $0x58] sm:$0xf]
    %v1043 = vld [vmem:[%s11 + $0x5c] sm:$0xf]
    %v1044 = vld [vmem:[%s11 + $0x60] sm:$0xf]
    %v1045 = vld [vmem:[%s11 + $0x64] sm:$0xf]
    %v1046 = vld [vmem:[%s11 + $0x68] sm:$0xf]
    %v1047 = vld [vmem:[%s11 + $0x6c] sm:$0xf]
    %v1048 = vld [vmem:[%s11 + $0x70] sm:$0xf]
    %v1049 = vld [vmem:[%s11 + $0x74] sm:$0xf]
    %v1050 = vld [vmem:[%s11 + $0x78] sm:$0xf]
    %v1051 = vld [vmem:[%s11 + $0x7c] sm:$0xf]
    %v1052 = vld [vmem:[%s11 + $0x80] sm:$0xf]
    %v1053 = vld [vmem:[%s11 + $0x84] sm:$0xf]
    %v1054 = vld [vmem:[%s11 + $0x88] sm:$0xf]
    %v1055 = vld [vmem:[%s11 + $0x8c] sm:$0xf]
    %v1056 = vld [vmem:[%s11 + $0x90] sm:$0xf]
    %v1057 = vld [vmem:[%s11 + $0x94] sm:$0xf]
    %v1058 = vld [vmem:[%s11 + $0x98] sm:$0xf]
    %v1059 = vld [vmem:[%s11 + $0x9c] sm:$0xf]
    %v1060 = vld [vmem:[%s11 + $0xa0] sm:$0xf]
    %v1061 = vld [vmem:[%s11 + $0xa4] sm:$0xf]
    %v1062 = vld [vmem:[%s11 + $0xa8] sm:$0xf]
    %v1063 = vld [vmem:[%s11 + $0xac] sm:$0xf]
    %v1064 = vld [vmem:[%s11 + $0xb0] sm:$0xf]
    %v1065 = vld [vmem:[%s11 + $0xb4] sm:$0xf]
    %v1066 = vld [vmem:[%s11 + $0xb8] sm:$0xf]
    %v1067 = vld [vmem:[%s11 + $0xbc] sm:$0xf]
    %v1068 = vld [vmem:[#allocation12] sm:$0x1]
    %v1070 = vlaneseq
    %v1071 = vshrl.u32 %v1070, 7
    %v1072 = vsub.s32 0, %v1071
    %v1073 = vrot.slane %v1068, %v1072
    %v1123 = vunpack.c.l.b16 %v1020
    %v1124 = vunpack.c.l.b16 %v1021
    %v1125 = vunpack.c.l.b16 %v1022
    %v1126 = vunpack.c.l.b16 %v1023
    %v1127 = vunpack.c.l.b16 %v1024
    %v1128 = vunpack.c.l.b16 %v1025
    %v1129 = vunpack.c.l.b16 %v1026
    %v1130 = vunpack.c.l.b16 %v1027
    %v1131 = vunpack.c.l.b16 %v1028
    %v1132 = vunpack.c.l.b16 %v1029
    %v1133 = vunpack.c.l.b16 %v1030
    %v1134 = vunpack.c.l.b16 %v1031
    %v1135 = vunpack.c.l.b16 %v1032
    %v1136 = vunpack.c.l.b16 %v1033
    %v1137 = vunpack.c.l.b16 %v1034
    %v1138 = vunpack.c.l.b16 %v1035
    %v1139 = vunpack.c.l.b16 %v1036
    %v1140 = vunpack.c.l.b16 %v1037
    %v1141 = vunpack.c.l.b16 %v1038
    %v1142 = vunpack.c.l.b16 %v1039
    %v1143 = vunpack.c.l.b16 %v1040
    %v1144 = vunpack.c.l.b16 %v1041
    %v1145 = vunpack.c.l.b16 %v1042
    %v1146 = vunpack.c.l.b16 %v1043
    %v1147 = vunpack.c.l.b16 %v1044
    %v1148 = vunpack.c.l.b16 %v1045
    %v1149 = vunpack.c.l.b16 %v1046
    %v1150 = vunpack.c.l.b16 %v1047
    %v1151 = vunpack.c.l.b16 %v1048
    %v1152 = vunpack.c.l.b16 %v1049
    %v1153 = vunpack.c.l.b16 %v1050
    %v1154 = vunpack.c.l.b16 %v1051
    %v1155 = vunpack.c.l.b16 %v1052
    %v1156 = vunpack.c.l.b16 %v1053
    %v1157 = vunpack.c.l.b16 %v1054
    %v1158 = vunpack.c.l.b16 %v1055
    %v1159 = vunpack.c.l.b16 %v1056
    %v1160 = vunpack.c.l.b16 %v1057
    %v1161 = vunpack.c.l.b16 %v1058
    %v1162 = vunpack.c.l.b16 %v1059
    %v1163 = vunpack.c.l.b16 %v1060
    %v1164 = vunpack.c.l.b16 %v1061
    %v1165 = vunpack.c.l.b16 %v1062
    %v1166 = vunpack.c.l.b16 %v1063
    %v1167 = vunpack.c.l.b16 %v1064
    %v1168 = vunpack.c.l.b16 %v1065
    %v1169 = vunpack.c.l.b16 %v1066
    %v1170 = vunpack.c.l.b16 %v1067
    %v1171 = vpack.c.b16 %v1124, %v1123
    %v1172 = vpack.c.b16 %v1126, %v1125
    %v1173 = vpack.c.b16 %v1128, %v1127
    %v1174 = vpack.c.b16 %v1130, %v1129
    %v1175 = vpack.c.b16 %v1132, %v1131
    %v1176 = vpack.c.b16 %v1134, %v1133
    %v1177 = vpack.c.b16 %v1136, %v1135
    %v1178 = vpack.c.b16 %v1138, %v1137
    %v1179 = vpack.c.b16 %v1140, %v1139
    %v1180 = vpack.c.b16 %v1142, %v1141
    %v1181 = vpack.c.b16 %v1144, %v1143
    %v1182 = vpack.c.b16 %v1146, %v1145
    %v1183 = vpack.c.b16 %v1148, %v1147
    %v1184 = vpack.c.b16 %v1150, %v1149
    %v1185 = vpack.c.b16 %v1152, %v1151
    %v1186 = vpack.c.b16 %v1154, %v1153
    %v1187 = vpack.c.b16 %v1156, %v1155
    %v1188 = vpack.c.b16 %v1158, %v1157
    %v1189 = vpack.c.b16 %v1160, %v1159
    %v1190 = vpack.c.b16 %v1162, %v1161
    %v1191 = vpack.c.b16 %v1164, %v1163
    %v1192 = vpack.c.b16 %v1166, %v1165
    %v1193 = vpack.c.b16 %v1168, %v1167
    %v1194 = vpack.c.b16 %v1170, %v1169
    %1219 = vmatprep.subr.bf16.mxu0 0
    %1220 = vmatpush1.bf16.msra.mxu0 %v1178
    %1221 = vmatprep.subr.bf16.mxu0 0
    %1222 = vmatpush1.bf16.msra.mxu0 %v1177
    %1223 = vmatprep.subr.bf16.mxu0 0
    %1224 = vmatpush1.bf16.msra.mxu0 %v1176
    %1225 = vmatprep.subr.bf16.mxu0 0
    %1226 = vmatpush1.bf16.msra.mxu0 %v1175
    %1227 = vmatprep.subr.bf16.mxu0 0
    %1228 = vmatpush1.bf16.msra.mxu0 %v1174
    %1229 = vmatprep.subr.bf16.mxu0 0
    %1230 = vmatpush1.bf16.msra.mxu0 %v1173
    %1231 = vmatprep.subr.bf16.mxu0 0
    %1232 = vmatpush1.bf16.msra.mxu0 %v1172
    %1233 = vmatprep.subr.bf16.mxu0 0
    %1234 = vmatpush1.bf16.msra.mxu0 %v1171
    %1235 = vmatprep.subr.bf16.mxu0 0
    %1236 = vmatpush2.bf16.msra.mxu0 %v1186
    %1237 = vmatprep.subr.bf16.mxu0 0
    %1238 = vmatpush2.bf16.msra.mxu0 %v1185
    %1239 = vmatprep.subr.bf16.mxu0 0
    %1240 = vmatpush2.bf16.msra.mxu0 %v1184
    %1241 = vmatprep.subr.bf16.mxu0 0
    %1242 = vmatpush2.bf16.msra.mxu0 %v1183
    %1243 = vmatprep.subr.bf16.mxu0 0
    %1244 = vmatpush2.bf16.msra.mxu0 %v1182
    %1245 = vmatprep.subr.bf16.mxu0 0
    %1246 = vmatpush2.bf16.msra.mxu0 %v1181
    %1247 = vmatprep.subr.bf16.mxu0 0
    %1248 = vmatpush2.bf16.msra.mxu0 %v1180
    %1249 = vmatprep.subr.bf16.mxu0 0
    %1250 = vmatpush2.bf16.msra.mxu0 %v1179
    %1251 = vmatprep.mubr.bf16.mxu0 %v1016
    %1252 = vmatmul.mubr.bf16.gmra.mxu0 %v1015
    %v1253 = vpop.f32.mrf.mxu0
    %v1254 = vadd.f32 %v1073, %v1253
    %v1255 = vpop.f32.mrf.mxu0
    %v1256 = vpop.f32.mrf.mxu0
    %v1257 = vadd.f32 %v1073, %v1256
    %v1258 = vpop.f32.mrf.mxu0
    %1259 = vmatprep.mubr.bf16.mxu0 %v1017
    %1260 = vmatmul.mubr.bf16.gmra.mxu0 %v1018
    %v1261 = vpop.f32.mrf.mxu0
    %v1262 = vadd.f32 %v1073, %v1261
    %v1263 = vpop.f32.mrf.mxu0
    %v1264 = vpop.f32.mrf.mxu0
    %v1265 = vadd.f32 %v1073, %v1264
    %v1266 = vpop.f32.mrf.mxu0
    %1267 = vdwg.mxu0
    %1268 = vmatprep.subr.bf16.mxu0 0
    %1269 = vmatpush1.bf16.msra.mxu0 %v1194
    %1270 = vmatprep.subr.bf16.mxu0 0
    %1271 = vmatpush1.bf16.msra.mxu0 %v1193
    %1272 = vmatprep.subr.bf16.mxu0 0
    %1273 = vmatpush1.bf16.msra.mxu0 %v1192
    %1274 = vmatprep.subr.bf16.mxu0 0
    %1275 = vmatpush1.bf16.msra.mxu0 %v1191
    %1276 = vmatprep.subr.bf16.mxu0 0
    %1277 = vmatpush1.bf16.msra.mxu0 %v1190
    %1278 = vmatprep.subr.bf16.mxu0 0
    %1279 = vmatpush1.bf16.msra.mxu0 %v1189
    %1280 = vmatprep.subr.bf16.mxu0 0
    %1281 = vmatpush1.bf16.msra.mxu0 %v1188
    %1282 = vmatprep.subr.bf16.mxu0 0
    %1283 = vmatpush1.bf16.msra.mxu0 %v1187
    %1284 = vmatprep.subr.bf16.mxu0 0
    %1285 = vmatpush2.bf16.msra.mxu0 0
    %1286 = vmatprep.subr.bf16.mxu0 0
    %1287 = vmatpush2.bf16.msra.mxu0 0
    %1288 = vmatprep.subr.bf16.mxu0 0
    %1289 = vmatpush2.bf16.msra.mxu0 0
    %1290 = vmatprep.subr.bf16.mxu0 0
    %1291 = vmatpush2.bf16.msra.mxu0 0
    %1292 = vmatprep.subr.bf16.mxu0 0
    %1293 = vmatpush2.bf16.msra.mxu0 0
    %1294 = vmatprep.subr.bf16.mxu0 0
    %1295 = vmatpush2.bf16.msra.mxu0 0
    %1296 = vmatprep.subr.bf16.mxu0 0
    %1297 = vmatpush2.bf16.msra.mxu0 0
    %1298 = vmatprep.subr.bf16.mxu0 0
    %1299 = vmatpush2.bf16.msra.mxu0 0
    %1300 = vmatprep.mubr.bf16.mxu0 0
    %1301 = vmatmul.mubr.bf16.gmra.mxu0 %v1017
    %v1302 = vpop.f32.mrf.mxu0
    %v1303 = vadd.f32 %v1254, %v1302
    %v1304 = vpop.f32.mrf.mxu0
    %v1305 = vpop.f32.mrf.mxu0
    %v1306 = vadd.f32 %v1257, %v1305
    %v1307 = vpop.f32.mrf.mxu0
    %1308 = vmatprep.mubr.bf16.mxu0 0
    %1309 = vmatmul.mubr.bf16.gmra.mxu0 %v1019
    %v1310 = vpop.f32.mrf.mxu0
    %v1311 = vadd.f32 %v1262, %v1310
    %v1312 = vpop.f32.mrf.mxu0
    %v1313 = vpop.f32.mrf.mxu0
    %v1314 = vadd.f32 %v1265, %v1313
    %v1315 = vpop.f32.mrf.mxu0
    %1316 = vdwg.mxu0
    %v1317 = vsub.f32 0.0, %v1303
    %v1318 = vsub.f32 0.0, %v1306
    %v1319 = vsub.f32 0.0, %v1311
    %v1320 = vsub.f32 0.0, %v1314
    %v1321 = vmul.f32 %v1317, 1.442695
    %v1322 = vpow.pop %v1321
    %v1323 = vmul.f32 %v1318, 1.442695
    %v1324 = vpow.pop %v1323
    %v1325 = vmul.f32 %v1319, 1.442695
    %v1326 = vpow.pop %v1325
    %v1327 = vmul.f32 %v1320, 1.442695
    %v1328 = vpow.pop %v1327
    %v1329 = vadd.f32 %v1322, 1.0
    %v1330 = vadd.f32 %v1324, 1.0
    %v1331 = vadd.f32 %v1326, 1.0
    %v1332 = vadd.f32 %v1328, 1.0
    %v1333 = vrcp.pop %v1329
    %v1334 = vmul.f32 1.0, %v1333
    %v1335 = vrcp.pop %v1330
    %v1336 = vmul.f32 1.0, %v1335
    %v1337 = vrcp.pop %v1331
    %v1338 = vmul.f32 1.0, %v1337
    %v1339 = vrcp.pop %v1332
    %v1340 = vmul.f32 1.0, %v1339
    %vm1341 = vcmask 64512
    %1342 = vst.msk [vmem:[%s13] sm:$0xff] %vm1341, %v1334
    %1343 = vst.msk [vmem:[%s13 + $0x8] sm:$0xff] %vm1341, %v1336
    %1344 = vst.msk [vmem:[%s13 + $0x10] sm:$0xff] %vm1341, %v1338
    %1345 = vst.msk [vmem:[%s13 + $0x18] sm:$0xff] %vm1341, %v1340
    // Predicated region
    $region82: #{decoder_seq_forward.1} parent=1 // pred_check
      _
    $region83: #{decoder_seq_forward.1} parent=1 // pred_check_branch
      %1347 = sbr.rel (0) target = $region85
    $region84: #{decoder_seq_forward.1} parent=1 // pred_region
      _
    $region85: #{decoder_seq_forward.1} parent=1 // pred_fallthru
      _
    // Predicated region
    $region86: #{decoder_seq_forward.1} parent=1 // pred_check
      _
    $region87: #{decoder_seq_forward.1} parent=1 // pred_check_branch
      %1349 = sbr.rel (0) target = $region89
    $region88: #{decoder_seq_forward.1} parent=1 // pred_region
      _
    $region89: #{decoder_seq_forward.1} parent=1 // pred_fallthru
      _
    %1350 = vsyncpa [#allocation3], 1
    %1351 = vsyncpa [#allocation5], 1
    %1352 = vsyncpa [#allocation8], 1
    %1353 = vsyncpa [#allocation11], 1

</llo_original>
